<compile_context>
chip_gen: v6e
topology: v6e:2x2x1
jax: 0.10.0
libtpu: 0.0.40
codegen_flags: <defaults>
</compile_context>

<pallas_src>
import jax
import jax.numpy as jnp
from jax import lax
from jax.experimental import pallas as pl
from jax.experimental.pallas import tpu as pltpu


def _make_mole_kernel(source_nums, ck, n_chunks):
    """Kernel factory: closes over static sizes (S, chunk width, #chunks)."""
    S = source_nums
    D = S + 3
    inv_d = 1.0 / D

    def kernel(d_ref, w_ref, o_ref):
        # Hoist the (tiny) weight loads out of the chunk loop.
        w1 = w_ref[0:18, 0:D]            # (18, D)  diag(gamma) @ W1, transposed
        b1 = w_ref[0:18, D:D + 1]        # (18, 1)  beta @ W1 + b1
        w2 = w_ref[24:31, 0:18]          # (7, 18)
        b2 = w_ref[24:31, 18:19]
        w3 = w_ref[32:37, 0:7]           # (5, 7)
        b3 = w_ref[32:37, 7:8]
        w4 = w_ref[40:45, 0:1]           # (5, 1)
        b4 = w_ref[40:41, 1:2]

        def body(j, carry):
            off = pl.multiple_of(j * ck, ck)            # ck is a multiple of 128

            xt = d_ref[0:S, pl.ds(off, ck)]             # (S, ck)
            t = d_ref[S:S + 1, pl.ds(off, ck)] * 0.01   # T / 100        (1, ck)
            pinv = 1.0 / d_ref[S + 1:S + 2, pl.ds(off, ck)]  # 1 / P     (1, ck)
            tp = t * pinv                               # (T/100)*(1/P)  (1, ck)

            # LayerNorm over the D virtual feature rows (x ++ T/100 ++ 1/P ++ T*P term)
            mean = (jnp.sum(xt, axis=0, keepdims=True) + t + pinv + tp) * inv_d
            dx = xt - mean
            dt = t - mean
            dp = pinv - mean
            dtp = tp - mean
            var = (jnp.sum(dx * dx, axis=0, keepdims=True)
                   + dt * dt + dp * dp + dtp * dtp) * inv_d
            rstd = lax.rsqrt(var + 1e-5)                # (1, ck)

            # Stack to (D, ck): D=S+3=8 is one sublane group -> cheap concat,
            # and layer 1 becomes a single K=D MXU matmul.
            xn = jnp.concatenate([dx, dt, dp, dtp], axis=0) * rstd

            h = jnp.tanh(jnp.dot(w1, xn, preferred_element_type=jnp.float32) + b1)  # (18, ck)
            h = jnp.tanh(jnp.dot(w2, h, preferred_element_type=jnp.float32) + b2)   # (7, ck)
            h = jnp.tanh(jnp.dot(w3, h, preferred_element_type=jnp.float32) + b3)   # (5, ck)
            # 5 -> 1: degenerate matmul done as a VPU weighted sublane-sum.
            y = jnp.tanh(jnp.sum(w4 * h, axis=0, keepdims=True) + b4)               # (1, ck)

            # Lane-dense, unmasked store (ck is a multiple of 128).
            o_ref[0:1, pl.ds(off, ck)] = 28.0 + y * 18.0
            return carry

        lax.fori_loop(0, n_chunks, body, 0)

    return kernel


def pack_params(params, source_nums):
    """Fold LayerNorm affine into layer 1 and pack all MLP params into one buffer."""
    gamma, beta, w1, b1, w2, b2, w3, b3, w4, b4 = params
    D = source_nums + 3
    gamma = gamma.reshape(D)
    beta = beta.reshape(D)

    w1f = (w1 * gamma[:, None]).T                      # (18, D)  diag(gamma) @ W1, transposed
    b1f = beta[None, :] @ w1 + b1.reshape(1, 18)       # (1, 18)  beta @ W1 + b1

    buf = jnp.zeros((48, 24), jnp.float32)
    buf = buf.at[0:18, 0:D].set(w1f)
    buf = buf.at[0:18, D:D + 1].set(b1f.T)             # (18, 1)
    buf = buf.at[24:31, 0:18].set(w2.T)                # (7, 18)
    buf = buf.at[24:31, 18:19].set(b2.reshape(7, 1))
    buf = buf.at[32:37, 0:7].set(w3.T)                 # (5, 7)
    buf = buf.at[32:37, 7:8].set(b3.reshape(5, 1))
    buf = buf.at[40:45, 0:1].set(w4.reshape(5, 1))     # W4 as a (5, 1) column
    buf = buf.at[40:41, 1:2].set(b4.reshape(1, 1))
    return buf


def mole_forward(x, T, P, params, *, tn=16384, ck=512):
    """x: (N, source_nums), T: (1, N), P: (1, N) -> (N, 1)."""
    N, S = x.shape
    assert ck % 128 == 0

    # Tile sizing: big tiles for DMA efficiency, but keep >= 2 grid steps when the
    # batch allows it (v7x: 2 TensorCores share the "parallel" axis).  tn_eff is a
    # multiple of the inner chunk width ck.
    half = -(-N // 2)
    tn_eff = max(ck, min(tn, -(-half // ck) * ck))
    n_pad = -(-N // tn_eff) * tn_eff
    grid = n_pad // tn_eff
    n_chunks = tn_eff // ck

    wp = pack_params(params, S)
    kernel = _make_mole_kernel(S, ck, n_chunks)

    # Rough per-element costs: matmuls + LN flops, 31 tanh + rsqrt + recip, slab I/O.
    flops_per = 2 * (S + 3) * 18 + 2 * 18 * 7 + 2 * 7 * 5 + 2 * 5 + 4 * (S + 3)
    cost = pl.CostEstimate(flops=flops_per * n_pad,
                           transcendentals=33 * n_pad,
                           bytes_accessed=(S + 3) * 4 * n_pad)

    @jax.jit
    def run(x, T, P, wp):
        # Single fused pass: transpose + cast + pack into one (S+2, n_pad) slab.
        d = jnp.concatenate(
            [x.astype(jnp.float32).T,
             T.astype(jnp.float32).reshape(1, N),
             P.astype(jnp.float32).reshape(1, N)], axis=0)             # (S+2, N)
        if n_pad != N:
            # Pad value 1.0 keeps 1/P finite in the tail lanes; no cross-lane
            # mixing happens in the kernel, and the tail is sliced off below.
            d = jnp.pad(d, ((0, 0), (0, n_pad - N)), constant_values=1.0)

        out = pl.pallas_call(
            kernel,
            out_shape=jax.ShapeDtypeStruct((1, n_pad), jnp.float32),
            grid=(grid,),
            in_specs=[
                pl.BlockSpec((S + 2, tn_eff), lambda i: (0, i)),   # packed x^T/T/P slab
                pl.BlockSpec(wp.shape, lambda i: (0, 0)),          # packed params (resident)
            ],
            out_specs=pl.BlockSpec((1, tn_eff), lambda i: (0, i)), # lane-dense output
            compiler_params=pltpu.CompilerParams(
                dimension_semantics=("parallel",),
                vmem_limit_bytes=32 * 1024 * 1024),
            cost_estimate=cost,
        )(d, wp)
        return out[0, :N].reshape(N, 1)

    return run(x, T, P, wp)


def init_params(key, source_nums):
    """Deterministic synthetic parameters matching the module's shapes."""
    D = source_nums + 3
    dims = [(D, 18), (18, 7), (7, 5), (5, 1)]
    keys = jax.random.split(key, 2 * len(dims))
    params = [
        jnp.ones((1, D), jnp.float32),    # LayerNorm gamma
        jnp.zeros((1, D), jnp.float32),   # LayerNorm beta
    ]
    for i, (fin, fout) in enumerate(dims):
        bound = 1.0 / jnp.sqrt(jnp.float32(fin))
        w = jax.random.uniform(keys[2 * i], (fin, fout), jnp.float32, -bound, bound)
        b = jax.random.uniform(keys[2 * i + 1], (1, fout), jnp.float32, -bound, bound)
        params += [w, b]
    return tuple(params)


def mole_reference(x, T, P, params):
    """Pure-JAX reference of the PyTorch forward for a correctness check."""
    gamma, beta, w1, b1, w2, b2, w3, b3, w4, b4 = params
    t_col = (T.T / 100.0).astype(jnp.float32)
    p_col = (1.0 / P.T).astype(jnp.float32)
    h = jnp.concatenate([x.astype(jnp.float32), t_col, p_col, t_col * p_col], axis=1)
    mean = h.mean(-1, keepdims=True)
    var = ((h - mean) ** 2).mean(-1, keepdims=True)
    h = (h - mean) / jnp.sqrt(var + 1e-5) * gamma + beta
    h = jnp.tanh(h @ w1 + b1)
    h = jnp.tanh(h @ w2 + b2)
    h = jnp.tanh(h @ w3 + b3)
    h = jnp.tanh(h @ w4 + b4)
    return 28.0 + h * 18.0


if __name__ == "__main__":
    source_nums = 5        # -> D = 8 features after the fused concat
    relation_nums = 4      # unused by forward (matches the module signature)
    N = 1024               # batch (number of molecules); 2 grid steps of 512 lanes

    key = jax.random.PRNGKey(0)
    kx, kt, kp, kw = jax.random.split(key, 4)

    x = jax.random.normal(kx, (N, source_nums), jnp.float32)
    T = jax.random.uniform(kt, (1, N), jnp.float32, 250.0, 400.0)   # temperatures
    P = jax.random.uniform(kp, (1, N), jnp.float32, 1.0, 10.0)      # pressures

    params = init_params(kw, source_nums)

    out = mole_forward(x, T, P, params)
    out = jax.block_until_ready(out)

    ref = mole_reference(x, T, P, params)
    assert out.shape == (N, 1)
    assert jnp.allclose(out, ref, atol=1e-4, rtol=1e-5), (out, ref)

    print("KERNEL_OK")
</pallas_src>

<mosaic_0001>
module attributes {stable_mosaic.version = 11 : i64} {
  func.func @kernel(%arg0: i32, %arg1: memref<7x512xf32, #tpu.memory_space<vmem>>, %arg2: memref<48x24xf32, #tpu.memory_space<vmem>>, %arg3: memref<1x512xf32, #tpu.memory_space<vmem>>) attributes {dimension_semantics = [#tpu.dimension_semantics<parallel>], iteration_bounds = array<i64: 2>, scalar_prefetch = 0 : i64, scratch_operands = 0 : i64, tpu.core_type = #tpu.core_type<tc>, window_params = [{transform_indices = @transform_0, window_bounds = array<i64: 7, 512>}, {pipeline_mode = #tpu.pipeline_mode<synchronous>, transform_indices = @transform_1, window_bounds = array<i64: 48, 24>}, {transform_indices = @transform_2, window_bounds = array<i64: 1, 512>}]} {
    %c0 = arith.constant 0 : index
    %c0_0 = arith.constant 0 : index
    %0 = vector.load %arg2[%c0, %c0_0] : memref<48x24xf32, #tpu.memory_space<vmem>>, vector<18x8xf32>
    %c0_1 = arith.constant 0 : index
    %c8 = arith.constant 8 : index
    %1 = vector.load %arg2[%c0_1, %c8] : memref<48x24xf32, #tpu.memory_space<vmem>>, vector<18x1xf32>
    %c24 = arith.constant 24 : index
    %c0_2 = arith.constant 0 : index
    %2 = vector.load %arg2[%c24, %c0_2] : memref<48x24xf32, #tpu.memory_space<vmem>>, vector<7x18xf32>
    %c24_3 = arith.constant 24 : index
    %c18 = arith.constant 18 : index
    %3 = vector.load %arg2[%c24_3, %c18] : memref<48x24xf32, #tpu.memory_space<vmem>>, vector<7x1xf32>
    %c32 = arith.constant 32 : index
    %c0_4 = arith.constant 0 : index
    %4 = vector.load %arg2[%c32, %c0_4] : memref<48x24xf32, #tpu.memory_space<vmem>>, vector<5x7xf32>
    %c32_5 = arith.constant 32 : index
    %c7 = arith.constant 7 : index
    %5 = vector.load %arg2[%c32_5, %c7] : memref<48x24xf32, #tpu.memory_space<vmem>>, vector<5x1xf32>
    %c40 = arith.constant 40 : index
    %c0_6 = arith.constant 0 : index
    %6 = vector.load %arg2[%c40, %c0_6] : memref<48x24xf32, #tpu.memory_space<vmem>>, vector<5x1xf32>
    %c40_7 = arith.constant 40 : index
    %c1 = arith.constant 1 : index
    %7 = vector.load %arg2[%c40_7, %c1] : memref<48x24xf32, #tpu.memory_space<vmem>>, vector<1x1xf32>
    %c0_i32 = arith.constant 0 : i32
    %c512_i32 = arith.constant 512 : i32
    %8 = arith.muli %c0_i32, %c512_i32 : i32
    %9 = tpu.assume_multiple %8, 512 : i32
    %c0_8 = arith.constant 0 : index
    %10 = arith.index_cast %9 : i32 to index
    %11 = vector.load %arg1[%c0_8, %10] : memref<7x512xf32, #tpu.memory_space<vmem>>, vector<5x512xf32>
    %c5 = arith.constant 5 : index
    %12 = arith.index_cast %9 : i32 to index
    %13 = vector.load %arg1[%c5, %12] : memref<7x512xf32, #tpu.memory_space<vmem>>, vector<1x512xf32>
    %cst = arith.constant 0.00999999977 : f32
    %14 = vector.broadcast %cst : f32 to vector<1x512xf32>
    %15 = arith.mulf %13, %14 : vector<1x512xf32>
    %c6 = arith.constant 6 : index
    %16 = arith.index_cast %9 : i32 to index
    %17 = vector.load %arg1[%c6, %16] : memref<7x512xf32, #tpu.memory_space<vmem>>, vector<1x512xf32>
    %cst_9 = arith.constant 1.000000e+00 : f32
    %18 = vector.broadcast %cst_9 : f32 to vector<1x512xf32>
    %19 = arith.divf %18, %17 : vector<1x512xf32>
    %20 = arith.mulf %15, %19 : vector<1x512xf32>
    %cst_10 = arith.constant dense<0.000000e+00> : vector<512xf32>
    %21 = vector.multi_reduction <add>, %11, %cst_10 [0] : vector<5x512xf32> to vector<512xf32>
    %22 = vector.shape_cast %21 : vector<512xf32> to vector<1x512xf32>
    %23 = arith.addf %22, %15 : vector<1x512xf32>
    %24 = arith.addf %23, %19 : vector<1x512xf32>
    %25 = arith.addf %24, %20 : vector<1x512xf32>
    %cst_11 = arith.constant 1.250000e-01 : f32
    %26 = vector.broadcast %cst_11 : f32 to vector<1x512xf32>
    %27 = arith.mulf %25, %26 : vector<1x512xf32>
    %28 = vector.broadcast %27 : vector<1x512xf32> to vector<5x512xf32>
    %29 = arith.subf %11, %28 : vector<5x512xf32>
    %30 = arith.subf %15, %27 : vector<1x512xf32>
    %31 = arith.subf %19, %27 : vector<1x512xf32>
    %32 = arith.subf %20, %27 : vector<1x512xf32>
    %33 = arith.mulf %29, %29 : vector<5x512xf32>
    %cst_12 = arith.constant dense<0.000000e+00> : vector<512xf32>
    %34 = vector.multi_reduction <add>, %33, %cst_12 [0] : vector<5x512xf32> to vector<512xf32>
    %35 = vector.shape_cast %34 : vector<512xf32> to vector<1x512xf32>
    %36 = arith.mulf %30, %30 : vector<1x512xf32>
    %37 = arith.addf %35, %36 : vector<1x512xf32>
    %38 = arith.mulf %31, %31 : vector<1x512xf32>
    %39 = arith.addf %37, %38 : vector<1x512xf32>
    %40 = arith.mulf %32, %32 : vector<1x512xf32>
    %41 = arith.addf %39, %40 : vector<1x512xf32>
    %cst_13 = arith.constant 1.250000e-01 : f32
    %42 = vector.broadcast %cst_13 : f32 to vector<1x512xf32>
    %43 = arith.mulf %41, %42 : vector<1x512xf32>
    %cst_14 = arith.constant 9.99999974E-6 : f32
    %44 = vector.broadcast %cst_14 : f32 to vector<1x512xf32>
    %45 = arith.addf %43, %44 : vector<1x512xf32>
    %46 = math.rsqrt %45 : vector<1x512xf32>
    %47 = tpu.concatenate %29, %30, %31, %32 in 0 : vector<5x512xf32>, vector<1x512xf32>, vector<1x512xf32>, vector<1x512xf32> -> vector<8x512xf32>
    %48 = vector.broadcast %46 : vector<1x512xf32> to vector<8x512xf32>
    %49 = arith.mulf %47, %48 : vector<8x512xf32>
    %cst_15 = arith.constant dense<0.000000e+00> : vector<18x512xf32>
    %50 = tpu.matmul %0, %49, %cst_15 {dimension_numbers = #tpu.dot_dimension_numbers<[1], [0], [0], [1], [0, 0, 1, 1], [], []>} : vector<18x8xf32>, vector<8x512xf32>, vector<18x512xf32> -> vector<18x512xf32>
    %51 = vector.broadcast %1 : vector<18x1xf32> to vector<18x512xf32>
    %52 = arith.addf %50, %51 : vector<18x512xf32>
    %53 = math.tanh %52 : vector<18x512xf32>
    %cst_16 = arith.constant dense<0.000000e+00> : vector<7x512xf32>
    %54 = tpu.matmul %2, %53, %cst_16 {dimension_numbers = #tpu.dot_dimension_numbers<[1], [0], [0], [1], [0, 0, 1, 1], [], []>} : vector<7x18xf32>, vector<18x512xf32>, vector<7x512xf32> -> vector<7x512xf32>
    %55 = vector.broadcast %3 : vector<7x1xf32> to vector<7x512xf32>
    %56 = arith.addf %54, %55 : vector<7x512xf32>
    %57 = math.tanh %56 : vector<7x512xf32>
    %cst_17 = arith.constant dense<0.000000e+00> : vector<5x512xf32>
    %58 = tpu.matmul %4, %57, %cst_17 {dimension_numbers = #tpu.dot_dimension_numbers<[1], [0], [0], [1], [0, 0, 1, 1], [], []>} : vector<5x7xf32>, vector<7x512xf32>, vector<5x512xf32> -> vector<5x512xf32>
    %59 = vector.broadcast %5 : vector<5x1xf32> to vector<5x512xf32>
    %60 = arith.addf %58, %59 : vector<5x512xf32>
    %61 = math.tanh %60 : vector<5x512xf32>
    %62 = vector.broadcast %6 : vector<5x1xf32> to vector<5x512xf32>
    %63 = arith.mulf %62, %61 : vector<5x512xf32>
    %cst_18 = arith.constant dense<0.000000e+00> : vector<512xf32>
    %64 = vector.multi_reduction <add>, %63, %cst_18 [0] : vector<5x512xf32> to vector<512xf32>
    %65 = vector.shape_cast %64 : vector<512xf32> to vector<1x512xf32>
    %66 = vector.broadcast %7 : vector<1x1xf32> to vector<1x512xf32>
    %67 = arith.addf %65, %66 : vector<1x512xf32>
    %68 = math.tanh %67 : vector<1x512xf32>
    %cst_19 = arith.constant 1.800000e+01 : f32
    %69 = vector.broadcast %cst_19 : f32 to vector<1x512xf32>
    %70 = arith.mulf %68, %69 : vector<1x512xf32>
    %cst_20 = arith.constant 2.800000e+01 : f32
    %71 = vector.broadcast %cst_20 : f32 to vector<1x512xf32>
    %72 = arith.addf %71, %70 : vector<1x512xf32>
    %c0_21 = arith.constant 0 : index
    %73 = arith.index_cast %9 : i32 to index
    %74 = vector.load %arg3[%c0_21, %73] : memref<1x512xf32, #tpu.memory_space<vmem>>, vector<1x512xf32>
    tpu.vector_store %arg3[%c0_21, %73], %72 {strides = array<i32>} : memref<1x512xf32, #tpu.memory_space<vmem>>, vector<1x512xf32>,
    %c1_i32 = arith.constant 1 : i32
    return
  }
  func.func @transform_0(%arg0: i32) -> (i32, i32) {
    %c0_i32 = arith.constant 0 : i32
    %c0_i32_0 = arith.constant 0 : i32
    return %c0_i32, %arg0 : i32, i32
  }
  func.func @transform_1(%arg0: i32) -> (i32, i32) {
    %c0_i32 = arith.constant 0 : i32
    %c0_i32_0 = arith.constant 0 : i32
    %c0_i32_1 = arith.constant 0 : i32
    return %c0_i32, %c0_i32_0 : i32, i32
  }
  func.func @transform_2(%arg0: i32) -> (i32, i32) {
    %c0_i32 = arith.constant 0 : i32
    %c0_i32_0 = arith.constant 0 : i32
    return %c0_i32, %arg0 : i32, i32
  }
}

</mosaic_0001>

<llo_original>
// kernel: run.1
$region0: #{run.1}
  #allocation0 [shape = 'u32[]', space=smem, size = 0x4, offset = 0x4, fixed_abs, tag = 'smem constant byte address 0x4 - core index']
  #allocation1 [shape = 'u32[144,128]{1,0:T(1,128)}', space=vmem, size = 0x12000, scoped, tag = 'internal scratch']
  %s0 = inlined_call_operand.vmem [shape: f32[7,1024], index: 0, kind: input, shape index: {}]
  %s1 = inlined_call_operand.vmem [shape: f32[48,24], index: 1, kind: input, shape index: {}]
  %s2 = inlined_call_operand.hbm [shape: f32[1,1024], index: 2, kind: output, shape index: {}]
  %s3 = sld [smem:[#allocation0]]
  $region41: #{run.1} parent=0
    _
  %s5 = ssub.s32 1, %s3
  %s6 = scalar_select 0, %s5, %s3
  $region1: #{run.1} parent=0
    #allocation2 [shape = 'u8[4096]{0}', space=vmem, size = 0x1000, scoped, tag = 'output window, operand 0']
    #allocation3 [shape = 's32[2]{0}', space=sflag, size = 0x8, scoped, tag = 'scoped memory for run.1']
    %7 = vsyncpa [#allocation3], 0
    %s8 = scalar_lea.sflag [#allocation3], 1
    %9 = vsyncpa %s8, 0
    loop: start=0, step=1, limit=4
    $region2: #{run.1} parent=1 // loop_pre_header
      _
    $region3: #{run.1} parent=1 // loop_header
      %s11 = sphi 0, %s15
      %p12 = scmp.ge.s32.totalorder %s11, 4
      %s21 = sphi 0, %s23
      %s24 = sphi 0, %s21
      %s25 = sphi 0, %s24
      %s41 = sphi 0, %s25
      %s45 = sphi 0, %s45
      %s47 = sphi 0, %s45
      %s48 = sphi 0, %s47
      %s62 = sphi 0, %s48
      %s68 = sphi 0, %s70
      %s71 = sphi 0, %s68
      %s72 = sphi 0, %s71
      %s88 = sphi 0, %s72
    $region4: #{run.1} parent=1 // loop_header_branch
      %14 = sbr.rel (%p12) target = $region8
    $region5: #{run.1} parent=1 // loop_body
      %s16 = ssub.s32 %s11, 1
      %s17 = ssub.s32 %s11, 2
      %s18 = sadd.s32 %s11, 1
      %s19 = ssub.s32 %s11, %s18
      %p20 = scmp.eq.s32.totalorder %s19, 0
      %s22 = sadd.s32 %s21, 1
      %s23 = scalar_select %p20, %s21, %s22
      %p26 = pneg %p20
      %p27 = scmp.eq.s32.totalorder %s11, 1
      %p28 = por %p26, %p27
      %p29 = scmp.ne.s32.totalorder %s21, %s24
      %p30 = scmp.eq.s32.totalorder %s11, 0
      %p31 = por %p29, %p30
      %p32 = scmp.ne.s32.totalorder %s21, %s24
      %p33 = scmp.eq.s32.totalorder %s16, 1
      %p34 = por %p32, %p33
      %p35 = scmp.ne.s32.totalorder %s24, %s25
      %p36 = scmp.eq.s32.totalorder %s16, 0
      %p37 = por %p35, %p36
      %p38 = scmp.ne.s32.totalorder %s24, %s25
      %p39 = scmp.eq.s32.totalorder %s17, 1
      %p40 = por %p38, %p39
      %p42 = scmp.ne.s32.totalorder %s25, %s41
      %p43 = scmp.eq.s32.totalorder %s17, 0
      %p44 = por %p42, %p43
      %s46 = sadd.s32 %s45, 1
      %p49 = scmp.eq.s32.totalorder %s11, 1
      %p50 = scmp.ne.s32.totalorder %s45, %s47
      %p51 = scmp.eq.s32.totalorder %s11, 0
      %p52 = por %p50, %p51
      %p53 = scmp.ne.s32.totalorder %s45, %s47
      %p54 = scmp.eq.s32.totalorder %s16, 1
      %p55 = por %p53, %p54
      %p56 = scmp.ne.s32.totalorder %s47, %s48
      %p57 = scmp.eq.s32.totalorder %s16, 0
      %p58 = por %p56, %p57
      %p59 = scmp.ne.s32.totalorder %s47, %s48
      %p60 = scmp.eq.s32.totalorder %s17, 1
      %p61 = por %p59, %p60
      %p63 = scmp.ne.s32.totalorder %s48, %s62
      %p64 = scmp.eq.s32.totalorder %s17, 0
      %p65 = por %p63, %p64
      %s66 = ssub.s32 %s11, %s18
      %p67 = scmp.eq.s32.totalorder %s66, 0
      %s69 = sadd.s32 %s68, 1
      %s70 = scalar_select %p67, %s68, %s69
      %p73 = pneg %p67
      %p74 = scmp.eq.s32.totalorder %s11, 1
      %p75 = por %p73, %p74
      %p76 = scmp.ne.s32.totalorder %s68, %s71
      %p77 = scmp.eq.s32.totalorder %s11, 0
      %p78 = por %p76, %p77
      %p79 = scmp.ne.s32.totalorder %s68, %s71
      %p80 = scmp.eq.s32.totalorder %s16, 1
      %p81 = por %p79, %p80
      %p82 = scmp.ne.s32.totalorder %s71, %s72
      %p83 = scmp.eq.s32.totalorder %s16, 0
      %p84 = por %p82, %p83
      %p85 = scmp.ne.s32.totalorder %s71, %s72
      %p86 = scmp.eq.s32.totalorder %s17, 1
      %p87 = por %p85, %p86
      %p89 = scmp.ne.s32.totalorder %s72, %s88
      %p90 = scmp.eq.s32.totalorder %s17, 0
      %p91 = por %p89, %p90
      %p92 = scmp.le.s32.totalorder 1, %s11
      %p93 = scmp.lt.s32.totalorder %s11, 3
      %p94 = pnand %p92, %p93
      %p95 = pneg %p94
      // Predicated region
      $region9: #{run.1} parent=5 // pred_check
        _
      $region10: #{run.1} parent=5 // pred_check_branch
        %97 = sbr.rel (%p94) target = $region12
      $region11: #{run.1} parent=5 // pred_region
        %s98 = ssub.s32 %s11, 1
        // Predicated region
        $region13: #{run.1} parent=11 // pred_check
          %p99 = pneg %p58
        $region14: #{run.1} parent=11 // pred_check_branch
          %101 = sbr.rel (%p99) target = $region16
        $region15: #{run.1} parent=11 // pred_region
          _
        $region16: #{run.1} parent=11 // pred_fallthru
          _
      $region12: #{run.1} parent=5 // pred_fallthru
        _
      %p102 = scmp.lt.s32.totalorder %s11, 2
      // Predicated region
      $region17: #{run.1} parent=5 // pred_check
        %p103 = pneg %p102
      $region18: #{run.1} parent=5 // pred_check_branch
        %105 = sbr.rel (%p103) target = $region20
      $region19: #{run.1} parent=5 // pred_region
        // Predicated region
        $region21: #{run.1} parent=19 // pred_check
          %p106 = pneg %p31
        $region22: #{run.1} parent=19 // pred_check_branch
          %108 = sbr.rel (%p106) target = $region24
        $region23: #{run.1} parent=19 // pred_region
          %s109 = smul.u32 4, %s11
          %p110 = scmp.lt.s32.totalorder %s109, 7
          %s111 = scalar_select %p110, %s109, 7
          %s112 = smul.addr %s111, 8
          %s113 = scalar_lea.vmem %s0, %s112
          %s114 = smul.u32 4, %s11
        $region24: #{run.1} parent=19 // pred_fallthru
          _
      $region20: #{run.1} parent=5 // pred_fallthru
        _
      %p115 = scmp.le.s32.totalorder 1, %s11
      %p116 = scmp.lt.s32.totalorder %s11, 3
      %p117 = pnand %p115, %p116
      %p118 = pneg %p117
      // Predicated region
      $region25: #{run.1} parent=5 // pred_check
        _
      $region26: #{run.1} parent=5 // pred_check_branch
        %120 = sbr.rel (%p117) target = $region28
      $region27: #{run.1} parent=5 // pred_region
        %s121 = ssub.s32 %s11, 1
        %s122 = smul.u32 4, %s16
        %p123 = scmp.lt.s32.totalorder %s122, 7
        %s124 = scalar_select %p123, %s122, 7
        %s125 = smul.addr %s124, 8
        %s126 = scalar_lea.vmem %s0, %s125
        %p127 = pneg %p37
        %p128 = pneg %p34
        %p129 = pneg %p58
        %p130 = pneg %p55
        %p131 = pneg %p84
        %p132 = pneg %p81
        %s133 = sand.u32 %s71, 1
        %s134 = scalar_lea.sflag [#allocation3], %s133
        %s135 = sand.u32 %s71, 1
        %s136 = smul.addr %s135, 4
        %s137 = scalar_lea.vmem [#allocation2], %s136
        %s138 = smul.u32 4, %s16
        %p139 = scmp.lt.s32.totalorder %s138, 7
        %s140 = scalar_select %p139, %s138, 7
        %s141 = smul.addr %s140, 8
        %s142 = scalar_lea.vmem %s0, %s141
        %s143 = smul.u32 4, %s16
        %s144 = smul.u32 4, %s16
        %v145 = vld [vmem:[%s1] sm:$0xff]
        %v146 = vld [vmem:[%s1 + $0x8] sm:$0xff]
        %v147 = vld [vmem:[%s1 + $0x10] sm:$0x3]
        %v148 = vld [vmem:[%s1 + $0x18] sm:$0x7f]
        %v149 = vld [vmem:[%s1 + $0x20] sm:$0x1f]
        %v150 = vld [vmem:[%s1 + $0x28] sm:$0x1f]
        %v151 = vld [vmem:[%s1 + $0x28] sm:$0x1]
        %v152 = vld [vmem:[%s142] sm:$0x1f]
        %v153 = vld [vmem:[%s142 + $0x8] sm:$0x1f]
        %v154 = vld [vmem:[%s142 + $0x10] sm:$0x1f]
        %v155 = vld [vmem:[%s142 + $0x18] sm:$0x1f]
        %s156 = scalar_lea.vmem %s142, 5
        %v157 = vld [vmem:[%s156] ss:$8 sm:$0xf]
        %v158 = vmul.f32 %v157, 0.01
        %s159 = scalar_lea.vmem %s142, 6
        %v160 = vld [vmem:[%s159] ss:$8 sm:$0xf]
        %v161 = vrcp.pop %v160
        %v162 = vmul.f32 1.0, %v161
        %v163 = vmul.f32 %v158, %v162
        %vm164 = vcmask 1044480
        %v165 = vsel %vm164, %v152, 0.0
        %v166 = vrot.slane %v165, 4
        %v167 = vadd.f32 %v165, %v166
        %v168 = vrot.slane %v167, 2
        %v169 = vadd.f32 %v167, %v168
        %v170 = vrot.slane %v169, 1
        %v171 = vadd.f32 %v169, %v170
        %v172 = vsel %vm164, %v153, 0.0
        %v173 = vrot.slane %v172, 4
        %v174 = vadd.f32 %v172, %v173
        %v175 = vrot.slane %v174, 2
        %v176 = vadd.f32 %v174, %v175
        %v177 = vrot.slane %v176, 1
        %v178 = vadd.f32 %v176, %v177
        %v179 = vsel %vm164, %v154, 0.0
        %v180 = vrot.slane %v179, 4
        %v181 = vadd.f32 %v179, %v180
        %v182 = vrot.slane %v181, 2
        %v183 = vadd.f32 %v181, %v182
        %v184 = vrot.slane %v183, 1
        %v185 = vadd.f32 %v183, %v184
        %v186 = vsel %vm164, %v155, 0.0
        %v187 = vrot.slane %v186, 4
        %v188 = vadd.f32 %v186, %v187
        %v189 = vrot.slane %v188, 2
        %v190 = vadd.f32 %v188, %v189
        %v191 = vrot.slane %v190, 1
        %v192 = vadd.f32 %v190, %v191
        %v194 = vlaneseq
        %v195 = vshrl.u32 %v194, 7
        %v196 = vsub.s32 0, %v195
        %v197 = vrot.slane %v158, %v196
        %v198 = vlaneseq
        %v199 = vshrl.u32 %v198, 7
        %v200 = vsub.s32 1, %v199
        %v201 = vrot.slane %v158, %v200
        %v202 = vlaneseq
        %v203 = vshrl.u32 %v202, 7
        %v204 = vsub.s32 2, %v203
        %v205 = vrot.slane %v158, %v204
        %v206 = vlaneseq
        %v207 = vshrl.u32 %v206, 7
        %v208 = vsub.s32 3, %v207
        %v209 = vrot.slane %v158, %v208
        %v214 = vadd.f32 %v171, %v197
        %v215 = vadd.f32 %v178, %v201
        %v216 = vadd.f32 %v185, %v205
        %v217 = vadd.f32 %v192, %v209
        %v219 = vlaneseq
        %v220 = vshrl.u32 %v219, 7
        %v221 = vsub.s32 0, %v220
        %v222 = vrot.slane %v162, %v221
        %v223 = vlaneseq
        %v224 = vshrl.u32 %v223, 7
        %v225 = vsub.s32 1, %v224
        %v226 = vrot.slane %v162, %v225
        %v227 = vlaneseq
        %v228 = vshrl.u32 %v227, 7
        %v229 = vsub.s32 2, %v228
        %v230 = vrot.slane %v162, %v229
        %v231 = vlaneseq
        %v232 = vshrl.u32 %v231, 7
        %v233 = vsub.s32 3, %v232
        %v234 = vrot.slane %v162, %v233
        %v239 = vadd.f32 %v214, %v222
        %v240 = vadd.f32 %v215, %v226
        %v241 = vadd.f32 %v216, %v230
        %v242 = vadd.f32 %v217, %v234
        %v244 = vlaneseq
        %v245 = vshrl.u32 %v244, 7
        %v246 = vsub.s32 0, %v245
        %v247 = vrot.slane %v163, %v246
        %v248 = vlaneseq
        %v249 = vshrl.u32 %v248, 7
        %v250 = vsub.s32 1, %v249
        %v251 = vrot.slane %v163, %v250
        %v252 = vlaneseq
        %v253 = vshrl.u32 %v252, 7
        %v254 = vsub.s32 2, %v253
        %v255 = vrot.slane %v163, %v254
        %v256 = vlaneseq
        %v257 = vshrl.u32 %v256, 7
        %v258 = vsub.s32 3, %v257
        %v259 = vrot.slane %v163, %v258
        %v264 = vadd.f32 %v239, %v247
        %v265 = vadd.f32 %v240, %v251
        %v266 = vadd.f32 %v241, %v255
        %v267 = vadd.f32 %v242, %v259
        %v268 = vmul.f32 %v264, 0.125
        %v269 = vmul.f32 %v265, 0.125
        %v270 = vmul.f32 %v266, 0.125
        %v271 = vmul.f32 %v267, 0.125
        %v272 = vlaneseq
        %v273 = vshrl.u32 %v272, 7
        %v274 = vsub.s32 0, %v273
        %v275 = vrot.slane %v268, %v274
        %v276 = vlaneseq
        %v277 = vshrl.u32 %v276, 7
        %v278 = vsub.s32 0, %v277
        %v279 = vrot.slane %v269, %v278
        %v280 = vlaneseq
        %v281 = vshrl.u32 %v280, 7
        %v282 = vsub.s32 0, %v281
        %v283 = vrot.slane %v270, %v282
        %v284 = vlaneseq
        %v285 = vshrl.u32 %v284, 7
        %v286 = vsub.s32 0, %v285
        %v287 = vrot.slane %v271, %v286
        %v288 = vsub.f32 %v152, %v275
        %v289 = vsub.f32 %v153, %v279
        %v290 = vsub.f32 %v154, %v283
        %v291 = vsub.f32 %v155, %v287
        %v296 = vcombine.low %v268, %v269
        %v297 = vcombine.low %v270, %v271
        %v299 = vunpack.c.l.s4 1966171168
        %v300 = vunpack.c.0.s8 %v299
        %v301 = vlaneseq
        %v302 = vshrl.u32 %v301, 7
        %v303 = vsub.s32 %v300, %v302
        %v304 = vrot.slane %v296, %v303
        %v306 = vunpack.c.l.s4 1966171168
        %v307 = vunpack.c.0.s8 %v306
        %v308 = vlaneseq
        %v309 = vshrl.u32 %v308, 7
        %v310 = vsub.s32 %v307, %v309
        %v311 = vrot.slane %v297, %v310
        %v312 = vcombine.low %v304, %v311
        %v314 = vunpack.c.l.s4 1966171168
        %v315 = vunpack.c.0.s8 %v314
        %v316 = vlaneseq
        %v317 = vshrl.u32 %v316, 7
        %v318 = vsub.s32 %v315, %v317
        %v319 = vrot.slane %v312, %v318
        %v321 = vsub.f32 %v158, %v319
        %v322 = vsub.f32 %v162, %v319
        %v323 = vsub.f32 %v163, %v319
        %v324 = vmul.f32 %v288, %v288
        %v325 = vmul.f32 %v289, %v289
        %v326 = vmul.f32 %v290, %v290
        %v327 = vmul.f32 %v291, %v291
        %v328 = vsel %vm164, %v324, 0.0
        %v329 = vrot.slane %v328, 4
        %v330 = vadd.f32 %v328, %v329
        %v331 = vrot.slane %v330, 2
        %v332 = vadd.f32 %v330, %v331
        %v333 = vrot.slane %v332, 1
        %v334 = vadd.f32 %v332, %v333
        %v335 = vsel %vm164, %v325, 0.0
        %v336 = vrot.slane %v335, 4
        %v337 = vadd.f32 %v335, %v336
        %v338 = vrot.slane %v337, 2
        %v339 = vadd.f32 %v337, %v338
        %v340 = vrot.slane %v339, 1
        %v341 = vadd.f32 %v339, %v340
        %v342 = vsel %vm164, %v326, 0.0
        %v343 = vrot.slane %v342, 4
        %v344 = vadd.f32 %v342, %v343
        %v345 = vrot.slane %v344, 2
        %v346 = vadd.f32 %v344, %v345
        %v347 = vrot.slane %v346, 1
        %v348 = vadd.f32 %v346, %v347
        %v349 = vsel %vm164, %v327, 0.0
        %v350 = vrot.slane %v349, 4
        %v351 = vadd.f32 %v349, %v350
        %v352 = vrot.slane %v351, 2
        %v353 = vadd.f32 %v351, %v352
        %v354 = vrot.slane %v353, 1
        %v355 = vadd.f32 %v353, %v354
        %v356 = vmul.f32 %v321, %v321
        %v358 = vlaneseq
        %v359 = vshrl.u32 %v358, 7
        %v360 = vsub.s32 0, %v359
        %v361 = vrot.slane %v356, %v360
        %v362 = vlaneseq
        %v363 = vshrl.u32 %v362, 7
        %v364 = vsub.s32 1, %v363
        %v365 = vrot.slane %v356, %v364
        %v366 = vlaneseq
        %v367 = vshrl.u32 %v366, 7
        %v368 = vsub.s32 2, %v367
        %v369 = vrot.slane %v356, %v368
        %v370 = vlaneseq
        %v371 = vshrl.u32 %v370, 7
        %v372 = vsub.s32 3, %v371
        %v373 = vrot.slane %v356, %v372
        %v378 = vadd.f32 %v334, %v361
        %v379 = vadd.f32 %v341, %v365
        %v380 = vadd.f32 %v348, %v369
        %v381 = vadd.f32 %v355, %v373
        %v382 = vmul.f32 %v322, %v322
        %v384 = vlaneseq
        %v385 = vshrl.u32 %v384, 7
        %v386 = vsub.s32 0, %v385
        %v387 = vrot.slane %v382, %v386
        %v388 = vlaneseq
        %v389 = vshrl.u32 %v388, 7
        %v390 = vsub.s32 1, %v389
        %v391 = vrot.slane %v382, %v390
        %v392 = vlaneseq
        %v393 = vshrl.u32 %v392, 7
        %v394 = vsub.s32 2, %v393
        %v395 = vrot.slane %v382, %v394
        %v396 = vlaneseq
        %v397 = vshrl.u32 %v396, 7
        %v398 = vsub.s32 3, %v397
        %v399 = vrot.slane %v382, %v398
        %v404 = vadd.f32 %v378, %v387
        %v405 = vadd.f32 %v379, %v391
        %v406 = vadd.f32 %v380, %v395
        %v407 = vadd.f32 %v381, %v399
        %v408 = vmul.f32 %v323, %v323
        %v410 = vlaneseq
        %v411 = vshrl.u32 %v410, 7
        %v412 = vsub.s32 0, %v411
        %v413 = vrot.slane %v408, %v412
        %v414 = vlaneseq
        %v415 = vshrl.u32 %v414, 7
        %v416 = vsub.s32 1, %v415
        %v417 = vrot.slane %v408, %v416
        %v418 = vlaneseq
        %v419 = vshrl.u32 %v418, 7
        %v420 = vsub.s32 2, %v419
        %v421 = vrot.slane %v408, %v420
        %v422 = vlaneseq
        %v423 = vshrl.u32 %v422, 7
        %v424 = vsub.s32 3, %v423
        %v425 = vrot.slane %v408, %v424
        %v430 = vadd.f32 %v404, %v413
        %v431 = vadd.f32 %v405, %v417
        %v432 = vadd.f32 %v406, %v421
        %v433 = vadd.f32 %v407, %v425
        %v434 = vmul.f32 %v430, 0.125
        %v435 = vmul.f32 %v431, 0.125
        %v436 = vmul.f32 %v432, 0.125
        %v437 = vmul.f32 %v433, 0.125
        %v438 = vadd.f32 %v434, 1e-05
        %v439 = vadd.f32 %v435, 1e-05
        %v440 = vadd.f32 %v436, 1e-05
        %v441 = vadd.f32 %v437, 1e-05
        %v442 = vrsqrt.pop %v438
        %v443 = vrsqrt.pop %v439
        %v444 = vrsqrt.pop %v440
        %v445 = vrsqrt.pop %v441
        %v447 = vlaneseq
        %v448 = vshrl.u32 %v447, 7
        %v449 = vsub.s32 0, %v448
        %v450 = vrot.slane %v321, %v449
        %v451 = vlaneseq
        %v452 = vshrl.u32 %v451, 7
        %v453 = vsub.s32 1, %v452
        %v454 = vrot.slane %v321, %v453
        %v455 = vlaneseq
        %v456 = vshrl.u32 %v455, 7
        %v457 = vsub.s32 2, %v456
        %v458 = vrot.slane %v321, %v457
        %v459 = vlaneseq
        %v460 = vshrl.u32 %v459, 7
        %v461 = vsub.s32 3, %v460
        %v462 = vrot.slane %v321, %v461
        %v468 = vlaneseq
        %v469 = vshrl.u32 %v468, 7
        %v470 = vsub.s32 0, %v469
        %v471 = vrot.slane %v322, %v470
        %v472 = vlaneseq
        %v473 = vshrl.u32 %v472, 7
        %v474 = vsub.s32 1, %v473
        %v475 = vrot.slane %v322, %v474
        %v476 = vlaneseq
        %v477 = vshrl.u32 %v476, 7
        %v478 = vsub.s32 2, %v477
        %v479 = vrot.slane %v322, %v478
        %v480 = vlaneseq
        %v481 = vshrl.u32 %v480, 7
        %v482 = vsub.s32 3, %v481
        %v483 = vrot.slane %v322, %v482
        %v489 = vlaneseq
        %v490 = vshrl.u32 %v489, 7
        %v491 = vsub.s32 0, %v490
        %v492 = vrot.slane %v323, %v491
        %v493 = vlaneseq
        %v494 = vshrl.u32 %v493, 7
        %v495 = vsub.s32 1, %v494
        %v496 = vrot.slane %v323, %v495
        %v497 = vlaneseq
        %v498 = vshrl.u32 %v497, 7
        %v499 = vsub.s32 2, %v498
        %v500 = vrot.slane %v323, %v499
        %v501 = vlaneseq
        %v502 = vshrl.u32 %v501, 7
        %v503 = vsub.s32 3, %v502
        %v504 = vrot.slane %v323, %v503
        %v509 = vsel %vm164, %v288, %v450
        %v510 = vsel %vm164, %v289, %v454
        %v511 = vsel %vm164, %v290, %v458
        %v512 = vsel %vm164, %v291, %v462
        %vm513 = vcmask 1045504
        %v514 = vsel %vm513, %v509, %v471
        %v515 = vsel %vm513, %v510, %v475
        %v516 = vsel %vm513, %v511, %v479
        %v517 = vsel %vm513, %v512, %v483
        %vm518 = vcmask 1046528
        %v519 = vsel %vm518, %v514, %v492
        %v520 = vsel %vm518, %v515, %v496
        %v521 = vsel %vm518, %v516, %v500
        %v522 = vsel %vm518, %v517, %v504
        %v523 = vlaneseq
        %v524 = vshrl.u32 %v523, 7
        %v525 = vsub.s32 0, %v524
        %v526 = vrot.slane %v442, %v525
        %v527 = vlaneseq
        %v528 = vshrl.u32 %v527, 7
        %v529 = vsub.s32 0, %v528
        %v530 = vrot.slane %v443, %v529
        %v531 = vlaneseq
        %v532 = vshrl.u32 %v531, 7
        %v533 = vsub.s32 0, %v532
        %v534 = vrot.slane %v444, %v533
        %v535 = vlaneseq
        %v536 = vshrl.u32 %v535, 7
        %v537 = vsub.s32 0, %v536
        %v538 = vrot.slane %v445, %v537
        %v539 = vmul.f32 %v519, %v526
        %v540 = vmul.f32 %v520, %v530
        %v541 = vmul.f32 %v521, %v534
        %v542 = vmul.f32 %v522, %v538
        %544 = vset.pattern.permute.xlu0 8
        %545 = vperm.xlu0 %544, %v145
        %v546 = vpop.permute.xlu0 %545
        %549 = vset.pattern.permute.xlu0 8
        %550 = vperm.xlu0 %549, %v146
        %v551 = vpop.permute.xlu0 %550
        %554 = vset.pattern.permute.xlu0 8
        %555 = vperm.xlu0 %554, %v147
        %v556 = vpop.permute.xlu0 %555
        %vm558 = vcmask 64512
        %v559 = vsel %vm558, %v145, 0
        %v561 = vsel %vm558, %v146, 0
        %v563 = vsel %vm558, %v147, 0
        %565 = vmatprep.subr.mxu0 0.0
        %566 = vmatpush1.msra.mxu0 0.0
        %567 = vmatprep.subr.mxu0 0.0
        %568 = vmatpush1.msra.mxu0 0.0
        %569 = vmatprep.subr.mxu0 0.0
        %570 = vmatpush1.msra.mxu0 0.0
        %571 = vmatprep.subr.mxu0 0.0
        %572 = vmatpush1.msra.mxu0 0.0
        %573 = vmatprep.subr.mxu0 0.0
        %574 = vmatpush1.msra.mxu0 0.0
        %575 = vmatprep.subr.mxu0 0.0
        %576 = vmatpush1.msra.mxu0 0.0
        %577 = vmatprep.subr.mxu0 0.0
        %578 = vmatpush1.msra.mxu0 0.0
        %579 = vmatprep.subr.mxu0 0.0
        %580 = vmatpush1.msra.mxu0 0.0
        %581 = vmatprep.subr.mxu0 0.0
        %582 = vmatpush1.msra.mxu0 0.0
        %583 = vmatprep.subr.mxu0 0.0
        %584 = vmatpush1.msra.mxu0 0.0
        %585 = vmatprep.subr.mxu0 0.0
        %586 = vmatpush1.msra.mxu0 0.0
        %587 = vmatprep.subr.mxu0 0.0
        %588 = vmatpush1.msra.mxu0 0.0
        %589 = vmatprep.subr.mxu0 0.0
        %590 = vmatpush1.msra.mxu0 0.0
        %591 = vmatprep.subr.mxu0 0.0
        %592 = vmatpush1.msra.mxu0 0.0
        %593 = vmatprep.subr.mxu0 0.0
        %594 = vmatpush1.msra.mxu0 0.0
        %595 = vmatprep.subr.mxu0 %v540
        %596 = vmatpush1.msra.mxu0 %v539
        %597 = vmatprep.subr.mxu0 0.0
        %598 = vmatpush2.msra.mxu0 0.0
        %599 = vmatprep.subr.mxu0 0.0
        %600 = vmatpush2.msra.mxu0 0.0
        %601 = vmatprep.subr.mxu0 0.0
        %602 = vmatpush2.msra.mxu0 0.0
        %603 = vmatprep.subr.mxu0 0.0
        %604 = vmatpush2.msra.mxu0 0.0
        %605 = vmatprep.subr.mxu0 0.0
        %606 = vmatpush2.msra.mxu0 0.0
        %607 = vmatprep.subr.mxu0 0.0
        %608 = vmatpush2.msra.mxu0 0.0
        %609 = vmatprep.subr.mxu0 0.0
        %610 = vmatpush2.msra.mxu0 0.0
        %611 = vmatprep.subr.mxu0 0.0
        %612 = vmatpush2.msra.mxu0 0.0
        %613 = vmatprep.subr.mxu0 0.0
        %614 = vmatpush2.msra.mxu0 0.0
        %615 = vmatprep.subr.mxu0 0.0
        %616 = vmatpush2.msra.mxu0 0.0
        %617 = vmatprep.subr.mxu0 0.0
        %618 = vmatpush2.msra.mxu0 0.0
        %619 = vmatprep.subr.mxu0 0.0
        %620 = vmatpush2.msra.mxu0 0.0
        %621 = vmatprep.subr.mxu0 0.0
        %622 = vmatpush2.msra.mxu0 0.0
        %623 = vmatprep.subr.mxu0 0.0
        %624 = vmatpush2.msra.mxu0 0.0
        %625 = vmatprep.subr.mxu0 0.0
        %626 = vmatpush2.msra.mxu0 0.0
        %627 = vmatprep.subr.mxu0 0.0
        %628 = vmatpush2.msra.mxu0 0.0
        %629 = vmatprep.mubr.f32.mxu0 0.0
        %630 = vmatmul.mubr.f32.gmra.mxu0 %v559
        %v631 = vpop.f32.mrf.mxu0
        %v632 = vadd.f32 %v546, %v631
        %v633 = vpop.f32.mrf.mxu0
        %v634 = vadd.f32 %v546, %v633
        %635 = vmatprep.mubr.f32.mxu0 0.0
        %636 = vmatmul.mubr.f32.gmra.mxu0 %v561
        %v637 = vpop.f32.mrf.mxu0
        %v638 = vadd.f32 %v551, %v637
        %v639 = vpop.f32.mrf.mxu0
        %v640 = vadd.f32 %v551, %v639
        %641 = vmatprep.mubr.f32.mxu0 0.0
        %642 = vmatmul.mubr.f32.gmra.mxu0 %v563
        %v643 = vpop.f32.mrf.mxu0
        %v644 = vadd.f32 %v556, %v643
        %v645 = vpop.f32.mrf.mxu0
        %v646 = vadd.f32 %v556, %v645
        %647 = vdwg.mxu0
        %648 = vmatprep.subr.mxu0 0.0
        %649 = vmatpush1.msra.mxu0 0.0
        %650 = vmatprep.subr.mxu0 0.0
        %651 = vmatpush1.msra.mxu0 0.0
        %652 = vmatprep.subr.mxu0 0.0
        %653 = vmatpush1.msra.mxu0 0.0
        %654 = vmatprep.subr.mxu0 0.0
        %655 = vmatpush1.msra.mxu0 0.0
        %656 = vmatprep.subr.mxu0 0.0
        %657 = vmatpush1.msra.mxu0 0.0
        %658 = vmatprep.subr.mxu0 0.0
        %659 = vmatpush1.msra.mxu0 0.0
        %660 = vmatprep.subr.mxu0 0.0
        %661 = vmatpush1.msra.mxu0 0.0
        %662 = vmatprep.subr.mxu0 0.0
        %663 = vmatpush1.msra.mxu0 0.0
        %664 = vmatprep.subr.mxu0 0.0
        %665 = vmatpush1.msra.mxu0 0.0
        %666 = vmatprep.subr.mxu0 0.0
        %667 = vmatpush1.msra.mxu0 0.0
        %668 = vmatprep.subr.mxu0 0.0
        %669 = vmatpush1.msra.mxu0 0.0
        %670 = vmatprep.subr.mxu0 0.0
        %671 = vmatpush1.msra.mxu0 0.0
        %672 = vmatprep.subr.mxu0 0.0
        %673 = vmatpush1.msra.mxu0 0.0
        %674 = vmatprep.subr.mxu0 0.0
        %675 = vmatpush1.msra.mxu0 0.0
        %676 = vmatprep.subr.mxu0 0.0
        %677 = vmatpush1.msra.mxu0 0.0
        %678 = vmatprep.subr.mxu0 %v542
        %679 = vmatpush1.msra.mxu0 %v541
        %680 = vmatprep.subr.mxu0 0.0
        %681 = vmatpush2.msra.mxu0 0.0
        %682 = vmatprep.subr.mxu0 0.0
        %683 = vmatpush2.msra.mxu0 0.0
        %684 = vmatprep.subr.mxu0 0.0
        %685 = vmatpush2.msra.mxu0 0.0
        %686 = vmatprep.subr.mxu0 0.0
        %687 = vmatpush2.msra.mxu0 0.0
        %688 = vmatprep.subr.mxu0 0.0
        %689 = vmatpush2.msra.mxu0 0.0
        %690 = vmatprep.subr.mxu0 0.0
        %691 = vmatpush2.msra.mxu0 0.0
        %692 = vmatprep.subr.mxu0 0.0
        %693 = vmatpush2.msra.mxu0 0.0
        %694 = vmatprep.subr.mxu0 0.0
        %695 = vmatpush2.msra.mxu0 0.0
        %696 = vmatprep.subr.mxu0 0.0
        %697 = vmatpush2.msra.mxu0 0.0
        %698 = vmatprep.subr.mxu0 0.0
        %699 = vmatpush2.msra.mxu0 0.0
        %700 = vmatprep.subr.mxu0 0.0
        %701 = vmatpush2.msra.mxu0 0.0
        %702 = vmatprep.subr.mxu0 0.0
        %703 = vmatpush2.msra.mxu0 0.0
        %704 = vmatprep.subr.mxu0 0.0
        %705 = vmatpush2.msra.mxu0 0.0
        %706 = vmatprep.subr.mxu0 0.0
        %707 = vmatpush2.msra.mxu0 0.0
        %708 = vmatprep.subr.mxu0 0.0
        %709 = vmatpush2.msra.mxu0 0.0
        %710 = vmatprep.subr.mxu0 0.0
        %711 = vmatpush2.msra.mxu0 0.0
        %712 = vmatprep.mubr.f32.mxu0 0.0
        %713 = vmatmul.mubr.f32.gmra.mxu0 %v559
        %v714 = vpop.f32.mrf.mxu0
        %v715 = vadd.f32 %v546, %v714
        %v716 = vpop.f32.mrf.mxu0
        %v717 = vadd.f32 %v546, %v716
        %718 = vmatprep.mubr.f32.mxu0 0.0
        %719 = vmatmul.mubr.f32.gmra.mxu0 %v561
        %v720 = vpop.f32.mrf.mxu0
        %v721 = vadd.f32 %v551, %v720
        %v722 = vpop.f32.mrf.mxu0
        %v723 = vadd.f32 %v551, %v722
        %724 = vmatprep.mubr.f32.mxu0 0.0
        %725 = vmatmul.mubr.f32.gmra.mxu0 %v563
        %v726 = vpop.f32.mrf.mxu0
        %v727 = vadd.f32 %v556, %v726
        %v728 = vpop.f32.mrf.mxu0
        %v729 = vadd.f32 %v556, %v728
        %730 = vdwg.mxu0
        %v731 = vtanh.pop %v632
        %v732 = vtanh.pop %v634
        %v733 = vtanh.pop %v715
        %v734 = vtanh.pop %v717
        %v735 = vtanh.pop %v638
        %v736 = vtanh.pop %v640
        %v737 = vtanh.pop %v721
        %v738 = vtanh.pop %v723
        %v739 = vtanh.pop %v644
        %v740 = vtanh.pop %v646
        %v741 = vtanh.pop %v727
        %v742 = vtanh.pop %v729
        %744 = vset.pattern.permute.xlu0 18
        %745 = vperm.xlu0 %744, %v148
        %v746 = vpop.permute.xlu0 %745
        %vm748 = vcmask 146432
        %v749 = vsel %vm748, %v148, 0
        %vm751 = vcmask 1041408
        %v753 = vsel %vm751, %v739, 0
        %v756 = vsel %vm751, %v740, 0
        %v759 = vsel %vm751, %v741, 0
        %v762 = vsel %vm751, %v742, 0
        %764 = vmatprep.subr.mxu0 0.0
        %765 = vmatpush1.msra.mxu0 0.0
        %766 = vmatprep.subr.mxu0 0.0
        %767 = vmatpush1.msra.mxu0 0.0
        %768 = vmatprep.subr.mxu0 0.0
        %769 = vmatpush1.msra.mxu0 0.0
        %770 = vmatprep.subr.mxu0 0.0
        %771 = vmatpush1.msra.mxu0 0.0
        %772 = vmatprep.subr.mxu0 0.0
        %773 = vmatpush1.msra.mxu0 0.0
        %774 = vmatprep.subr.mxu0 0.0
        %775 = vmatpush1.msra.mxu0 0.0
        %776 = vmatprep.subr.mxu0 0.0
        %777 = vmatpush1.msra.mxu0 0.0
        %778 = vmatprep.subr.mxu0 0.0
        %779 = vmatpush1.msra.mxu0 0.0
        %780 = vmatprep.subr.mxu0 0.0
        %781 = vmatpush1.msra.mxu0 0.0
        %782 = vmatprep.subr.mxu0 0.0
        %783 = vmatpush1.msra.mxu0 0.0
        %784 = vmatprep.subr.mxu0 0.0
        %785 = vmatpush1.msra.mxu0 0.0
        %786 = vmatprep.subr.mxu0 0.0
        %787 = vmatpush1.msra.mxu0 0.0
        %788 = vmatprep.subr.mxu0 0.0
        %789 = vmatpush1.msra.mxu0 0.0
        %790 = vmatprep.subr.mxu0 %v756
        %791 = vmatpush1.msra.mxu0 %v753
        %792 = vmatprep.subr.mxu0 %v736
        %793 = vmatpush1.msra.mxu0 %v735
        %794 = vmatprep.subr.mxu0 %v732
        %795 = vmatpush1.msra.mxu0 %v731
        %796 = vmatprep.subr.mxu0 0.0
        %797 = vmatpush2.msra.mxu0 0.0
        %798 = vmatprep.subr.mxu0 0.0
        %799 = vmatpush2.msra.mxu0 0.0
        %800 = vmatprep.subr.mxu0 0.0
        %801 = vmatpush2.msra.mxu0 0.0
        %802 = vmatprep.subr.mxu0 0.0
        %803 = vmatpush2.msra.mxu0 0.0
        %804 = vmatprep.subr.mxu0 0.0
        %805 = vmatpush2.msra.mxu0 0.0
        %806 = vmatprep.subr.mxu0 0.0
        %807 = vmatpush2.msra.mxu0 0.0
        %808 = vmatprep.subr.mxu0 0.0
        %809 = vmatpush2.msra.mxu0 0.0
        %810 = vmatprep.subr.mxu0 0.0
        %811 = vmatpush2.msra.mxu0 0.0
        %812 = vmatprep.subr.mxu0 0.0
        %813 = vmatpush2.msra.mxu0 0.0
        %814 = vmatprep.subr.mxu0 0.0
        %815 = vmatpush2.msra.mxu0 0.0
        %816 = vmatprep.subr.mxu0 0.0
        %817 = vmatpush2.msra.mxu0 0.0
        %818 = vmatprep.subr.mxu0 0.0
        %819 = vmatpush2.msra.mxu0 0.0
        %820 = vmatprep.subr.mxu0 0.0
        %821 = vmatpush2.msra.mxu0 0.0
        %822 = vmatprep.subr.mxu0 0.0
        %823 = vmatpush2.msra.mxu0 0.0
        %824 = vmatprep.subr.mxu0 0.0
        %825 = vmatpush2.msra.mxu0 0.0
        %826 = vmatprep.subr.mxu0 0.0
        %827 = vmatpush2.msra.mxu0 0.0
        %828 = vmatprep.mubr.f32.mxu0 0.0
        %829 = vmatmul.mubr.f32.gmra.mxu0 %v749
        %v830 = vpop.f32.mrf.mxu0
        %v831 = vadd.f32 %v746, %v830
        %v832 = vpop.f32.mrf.mxu0
        %v833 = vadd.f32 %v746, %v832
        %834 = vdwg.mxu0
        %835 = vmatprep.subr.mxu0 0.0
        %836 = vmatpush1.msra.mxu0 0.0
        %837 = vmatprep.subr.mxu0 0.0
        %838 = vmatpush1.msra.mxu0 0.0
        %839 = vmatprep.subr.mxu0 0.0
        %840 = vmatpush1.msra.mxu0 0.0
        %841 = vmatprep.subr.mxu0 0.0
        %842 = vmatpush1.msra.mxu0 0.0
        %843 = vmatprep.subr.mxu0 0.0
        %844 = vmatpush1.msra.mxu0 0.0
        %845 = vmatprep.subr.mxu0 0.0
        %846 = vmatpush1.msra.mxu0 0.0
        %847 = vmatprep.subr.mxu0 0.0
        %848 = vmatpush1.msra.mxu0 0.0
        %849 = vmatprep.subr.mxu0 0.0
        %850 = vmatpush1.msra.mxu0 0.0
        %851 = vmatprep.subr.mxu0 0.0
        %852 = vmatpush1.msra.mxu0 0.0
        %853 = vmatprep.subr.mxu0 0.0
        %854 = vmatpush1.msra.mxu0 0.0
        %855 = vmatprep.subr.mxu0 0.0
        %856 = vmatpush1.msra.mxu0 0.0
        %857 = vmatprep.subr.mxu0 0.0
        %858 = vmatpush1.msra.mxu0 0.0
        %859 = vmatprep.subr.mxu0 0.0
        %860 = vmatpush1.msra.mxu0 0.0
        %861 = vmatprep.subr.mxu0 %v762
        %862 = vmatpush1.msra.mxu0 %v759
        %863 = vmatprep.subr.mxu0 %v738
        %864 = vmatpush1.msra.mxu0 %v737
        %865 = vmatprep.subr.mxu0 %v734
        %866 = vmatpush1.msra.mxu0 %v733
        %867 = vmatprep.subr.mxu0 0.0
        %868 = vmatpush2.msra.mxu0 0.0
        %869 = vmatprep.subr.mxu0 0.0
        %870 = vmatpush2.msra.mxu0 0.0
        %871 = vmatprep.subr.mxu0 0.0
        %872 = vmatpush2.msra.mxu0 0.0
        %873 = vmatprep.subr.mxu0 0.0
        %874 = vmatpush2.msra.mxu0 0.0
        %875 = vmatprep.subr.mxu0 0.0
        %876 = vmatpush2.msra.mxu0 0.0
        %877 = vmatprep.subr.mxu0 0.0
        %878 = vmatpush2.msra.mxu0 0.0
        %879 = vmatprep.subr.mxu0 0.0
        %880 = vmatpush2.msra.mxu0 0.0
        %881 = vmatprep.subr.mxu0 0.0
        %882 = vmatpush2.msra.mxu0 0.0
        %883 = vmatprep.subr.mxu0 0.0
        %884 = vmatpush2.msra.mxu0 0.0
        %885 = vmatprep.subr.mxu0 0.0
        %886 = vmatpush2.msra.mxu0 0.0
        %887 = vmatprep.subr.mxu0 0.0
        %888 = vmatpush2.msra.mxu0 0.0
        %889 = vmatprep.subr.mxu0 0.0
        %890 = vmatpush2.msra.mxu0 0.0
        %891 = vmatprep.subr.mxu0 0.0
        %892 = vmatpush2.msra.mxu0 0.0
        %893 = vmatprep.subr.mxu0 0.0
        %894 = vmatpush2.msra.mxu0 0.0
        %895 = vmatprep.subr.mxu0 0.0
        %896 = vmatpush2.msra.mxu0 0.0
        %897 = vmatprep.subr.mxu0 0.0
        %898 = vmatpush2.msra.mxu0 0.0
        %899 = vmatprep.mubr.f32.mxu0 0.0
        %900 = vmatmul.mubr.f32.gmra.mxu0 %v749
        %v901 = vpop.f32.mrf.mxu0
        %v902 = vadd.f32 %v746, %v901
        %v903 = vpop.f32.mrf.mxu0
        %v904 = vadd.f32 %v746, %v903
        %905 = vdwg.mxu0
        %v906 = vtanh.pop %v831
        %v907 = vtanh.pop %v833
        %v908 = vtanh.pop %v902
        %v909 = vtanh.pop %v904
        %911 = vset.pattern.permute.xlu0 7
        %912 = vperm.xlu0 %911, %v149
        %v913 = vpop.permute.xlu0 %912
        %vm915 = vcmask 56320
        %v916 = vsel %vm915, %v149, 0
        %v919 = vsel %vm518, %v906, 0
        %v922 = vsel %vm518, %v907, 0
        %v925 = vsel %vm518, %v908, 0
        %v928 = vsel %vm518, %v909, 0
        %930 = vmatprep.subr.mxu0 0.0
        %931 = vmatpush1.msra.mxu0 0.0
        %932 = vmatprep.subr.mxu0 0.0
        %933 = vmatpush1.msra.mxu0 0.0
        %934 = vmatprep.subr.mxu0 0.0
        %935 = vmatpush1.msra.mxu0 0.0
        %936 = vmatprep.subr.mxu0 0.0
        %937 = vmatpush1.msra.mxu0 0.0
        %938 = vmatprep.subr.mxu0 0.0
        %939 = vmatpush1.msra.mxu0 0.0
        %940 = vmatprep.subr.mxu0 0.0
        %941 = vmatpush1.msra.mxu0 0.0
        %942 = vmatprep.subr.mxu0 0.0
        %943 = vmatpush1.msra.mxu0 0.0
        %944 = vmatprep.subr.mxu0 0.0
        %945 = vmatpush1.msra.mxu0 0.0
        %946 = vmatprep.subr.mxu0 0.0
        %947 = vmatpush1.msra.mxu0 0.0
        %948 = vmatprep.subr.mxu0 0.0
        %949 = vmatpush1.msra.mxu0 0.0
        %950 = vmatprep.subr.mxu0 0.0
        %951 = vmatpush1.msra.mxu0 0.0
        %952 = vmatprep.subr.mxu0 0.0
        %953 = vmatpush1.msra.mxu0 0.0
        %954 = vmatprep.subr.mxu0 0.0
        %955 = vmatpush1.msra.mxu0 0.0
        %956 = vmatprep.subr.mxu0 0.0
        %957 = vmatpush1.msra.mxu0 0.0
        %958 = vmatprep.subr.mxu0 0.0
        %959 = vmatpush1.msra.mxu0 0.0
        %960 = vmatprep.subr.mxu0 %v922
        %961 = vmatpush1.msra.mxu0 %v919
        %962 = vmatprep.subr.mxu0 0.0
        %963 = vmatpush2.msra.mxu0 0.0
        %964 = vmatprep.subr.mxu0 0.0
        %965 = vmatpush2.msra.mxu0 0.0
        %966 = vmatprep.subr.mxu0 0.0
        %967 = vmatpush2.msra.mxu0 0.0
        %968 = vmatprep.subr.mxu0 0.0
        %969 = vmatpush2.msra.mxu0 0.0
        %970 = vmatprep.subr.mxu0 0.0
        %971 = vmatpush2.msra.mxu0 0.0
        %972 = vmatprep.subr.mxu0 0.0
        %973 = vmatpush2.msra.mxu0 0.0
        %974 = vmatprep.subr.mxu0 0.0
        %975 = vmatpush2.msra.mxu0 0.0
        %976 = vmatprep.subr.mxu0 0.0
        %977 = vmatpush2.msra.mxu0 0.0
        %978 = vmatprep.subr.mxu0 0.0
        %979 = vmatpush2.msra.mxu0 0.0
        %980 = vmatprep.subr.mxu0 0.0
        %981 = vmatpush2.msra.mxu0 0.0
        %982 = vmatprep.subr.mxu0 0.0
        %983 = vmatpush2.msra.mxu0 0.0
        %984 = vmatprep.subr.mxu0 0.0
        %985 = vmatpush2.msra.mxu0 0.0
        %986 = vmatprep.subr.mxu0 0.0
        %987 = vmatpush2.msra.mxu0 0.0
        %988 = vmatprep.subr.mxu0 0.0
        %989 = vmatpush2.msra.mxu0 0.0
        %990 = vmatprep.subr.mxu0 0.0
        %991 = vmatpush2.msra.mxu0 0.0
        %992 = vmatprep.subr.mxu0 0.0
        %993 = vmatpush2.msra.mxu0 0.0
        %994 = vmatprep.mubr.f32.mxu0 0.0
        %995 = vmatmul.mubr.f32.gmra.mxu0 %v916
        %v996 = vpop.f32.mrf.mxu0
        %v997 = vadd.f32 %v913, %v996
        %v998 = vpop.f32.mrf.mxu0
        %v999 = vadd.f32 %v913, %v998
        %1000 = vdwg.mxu0
        %1001 = vmatprep.subr.mxu0 0.0
        %1002 = vmatpush1.msra.mxu0 0.0
        %1003 = vmatprep.subr.mxu0 0.0
        %1004 = vmatpush1.msra.mxu0 0.0
        %1005 = vmatprep.subr.mxu0 0.0
        %1006 = vmatpush1.msra.mxu0 0.0
        %1007 = vmatprep.subr.mxu0 0.0
        %1008 = vmatpush1.msra.mxu0 0.0
        %1009 = vmatprep.subr.mxu0 0.0
        %1010 = vmatpush1.msra.mxu0 0.0
        %1011 = vmatprep.subr.mxu0 0.0
        %1012 = vmatpush1.msra.mxu0 0.0
        %1013 = vmatprep.subr.mxu0 0.0
        %1014 = vmatpush1.msra.mxu0 0.0
        %1015 = vmatprep.subr.mxu0 0.0
        %1016 = vmatpush1.msra.mxu0 0.0
        %1017 = vmatprep.subr.mxu0 0.0
        %1018 = vmatpush1.msra.mxu0 0.0
        %1019 = vmatprep.subr.mxu0 0.0
        %1020 = vmatpush1.msra.mxu0 0.0
        %1021 = vmatprep.subr.mxu0 0.0
        %1022 = vmatpush1.msra.mxu0 0.0
        %1023 = vmatprep.subr.mxu0 0.0
        %1024 = vmatpush1.msra.mxu0 0.0
        %1025 = vmatprep.subr.mxu0 0.0
        %1026 = vmatpush1.msra.mxu0 0.0
        %1027 = vmatprep.subr.mxu0 0.0
        %1028 = vmatpush1.msra.mxu0 0.0
        %1029 = vmatprep.subr.mxu0 0.0
        %1030 = vmatpush1.msra.mxu0 0.0
        %1031 = vmatprep.subr.mxu0 %v928
        %1032 = vmatpush1.msra.mxu0 %v925
        %1033 = vmatprep.subr.mxu0 0.0
        %1034 = vmatpush2.msra.mxu0 0.0
        %1035 = vmatprep.subr.mxu0 0.0
        %1036 = vmatpush2.msra.mxu0 0.0
        %1037 = vmatprep.subr.mxu0 0.0
        %1038 = vmatpush2.msra.mxu0 0.0
        %1039 = vmatprep.subr.mxu0 0.0
        %1040 = vmatpush2.msra.mxu0 0.0
        %1041 = vmatprep.subr.mxu0 0.0
        %1042 = vmatpush2.msra.mxu0 0.0
        %1043 = vmatprep.subr.mxu0 0.0
        %1044 = vmatpush2.msra.mxu0 0.0
        %1045 = vmatprep.subr.mxu0 0.0
        %1046 = vmatpush2.msra.mxu0 0.0
        %1047 = vmatprep.subr.mxu0 0.0
        %1048 = vmatpush2.msra.mxu0 0.0
        %1049 = vmatprep.subr.mxu0 0.0
        %1050 = vmatpush2.msra.mxu0 0.0
        %1051 = vmatprep.subr.mxu0 0.0
        %1052 = vmatpush2.msra.mxu0 0.0
        %1053 = vmatprep.subr.mxu0 0.0
        %1054 = vmatpush2.msra.mxu0 0.0
        %1055 = vmatprep.subr.mxu0 0.0
        %1056 = vmatpush2.msra.mxu0 0.0
        %1057 = vmatprep.subr.mxu0 0.0
        %1058 = vmatpush2.msra.mxu0 0.0
        %1059 = vmatprep.subr.mxu0 0.0
        %1060 = vmatpush2.msra.mxu0 0.0
        %1061 = vmatprep.subr.mxu0 0.0
        %1062 = vmatpush2.msra.mxu0 0.0
        %1063 = vmatprep.subr.mxu0 0.0
        %1064 = vmatpush2.msra.mxu0 0.0
        %1065 = vmatprep.mubr.f32.mxu0 0.0
        %1066 = vmatmul.mubr.f32.gmra.mxu0 %v916
        %v1067 = vpop.f32.mrf.mxu0
        %v1068 = vadd.f32 %v913, %v1067
        %v1069 = vpop.f32.mrf.mxu0
        %v1070 = vadd.f32 %v913, %v1069
        %1071 = vdwg.mxu0
        %v1072 = vtanh.pop %v997
        %v1073 = vtanh.pop %v999
        %v1074 = vtanh.pop %v1068
        %v1075 = vtanh.pop %v1070
        %1077 = vset.pattern.permute.xlu0 0
        %1078 = vperm.xlu0 %1077, %v150
        %v1079 = vpop.permute.xlu0 %1078
        %v1081 = vmul.f32 %v1079, %v1072
        %v1082 = vmul.f32 %v1079, %v1073
        %v1083 = vmul.f32 %v1079, %v1074
        %v1084 = vmul.f32 %v1079, %v1075
        %v1085 = vsel %vm164, %v1081, 0.0
        %v1086 = vrot.slane %v1085, 4
        %v1087 = vadd.f32 %v1085, %v1086
        %v1088 = vrot.slane %v1087, 2
        %v1089 = vadd.f32 %v1087, %v1088
        %v1090 = vrot.slane %v1089, 1
        %v1091 = vadd.f32 %v1089, %v1090
        %v1092 = vsel %vm164, %v1082, 0.0
        %v1093 = vrot.slane %v1092, 4
        %v1094 = vadd.f32 %v1092, %v1093
        %v1095 = vrot.slane %v1094, 2
        %v1096 = vadd.f32 %v1094, %v1095
        %v1097 = vrot.slane %v1096, 1
        %v1098 = vadd.f32 %v1096, %v1097
        %v1099 = vsel %vm164, %v1083, 0.0
        %v1100 = vrot.slane %v1099, 4
        %v1101 = vadd.f32 %v1099, %v1100
        %v1102 = vrot.slane %v1101, 2
        %v1103 = vadd.f32 %v1101, %v1102
        %v1104 = vrot.slane %v1103, 1
        %v1105 = vadd.f32 %v1103, %v1104
        %v1106 = vsel %vm164, %v1084, 0.0
        %v1107 = vrot.slane %v1106, 4
        %v1108 = vadd.f32 %v1106, %v1107
        %v1109 = vrot.slane %v1108, 2
        %v1110 = vadd.f32 %v1108, %v1109
        %v1111 = vrot.slane %v1110, 1
        %v1112 = vadd.f32 %v1110, %v1111
        %1114 = vset.pattern.permute.xlu0 1
        %1115 = vperm.xlu0 %1114, %v151
        %v1116 = vpop.permute.xlu0 %1115
        %v1118 = vadd.f32 %v1091, %v1116
        %v1119 = vadd.f32 %v1098, %v1116
        %v1120 = vadd.f32 %v1105, %v1116
        %v1121 = vadd.f32 %v1112, %v1116
        %v1122 = vtanh.pop %v1118
        %v1123 = vtanh.pop %v1119
        %v1124 = vtanh.pop %v1120
        %v1125 = vtanh.pop %v1121
        %v1126 = vmul.f32 %v1122, 18.0
        %v1127 = vmul.f32 %v1123, 18.0
        %v1128 = vmul.f32 %v1124, 18.0
        %v1129 = vmul.f32 %v1125, 18.0
        %v1130 = vadd.f32 %v1126, 28.0
        %v1131 = vadd.f32 %v1127, 28.0
        %v1132 = vadd.f32 %v1128, 28.0
        %v1133 = vadd.f32 %v1129, 28.0
        %v1138 = vcombine.low %v1130, %v1131
        %v1139 = vcombine.low %v1132, %v1133
        %v1141 = vunpack.c.l.s4 1966171168
        %v1142 = vunpack.c.0.s8 %v1141
        %v1143 = vlaneseq
        %v1144 = vshrl.u32 %v1143, 7
        %v1145 = vsub.s32 %v1142, %v1144
        %v1146 = vrot.slane %v1138, %v1145
        %v1148 = vunpack.c.l.s4 1966171168
        %v1149 = vunpack.c.0.s8 %v1148
        %v1150 = vlaneseq
        %v1151 = vshrl.u32 %v1150, 7
        %v1152 = vsub.s32 %v1149, %v1151
        %v1153 = vrot.slane %v1139, %v1152
        %v1154 = vcombine.low %v1146, %v1153
        %v1156 = vunpack.c.l.s4 1966171168
        %v1157 = vunpack.c.0.s8 %v1156
        %v1158 = vlaneseq
        %v1159 = vshrl.u32 %v1158, 7
        %v1160 = vsub.s32 %v1157, %v1159
        %v1161 = vrot.slane %v1154, %v1160
        %v1163 = vlaneseq
        %vm1164 = vcmp.ge.s32.totalorder %v1163, 0
        %vm1165 = vcmp.lt.s32.totalorder %v1163, 512
        %vm1166 = vmand %vm1164, %vm1165
        %1167 = vst.msk [vmem:[%s137] sm:$0xf] %vm1166, %v1161
        %s1168 = sand.u32 %s71, 1
        %s1169 = scalar_lea.sflag [#allocation3], %s1168
        %s1170 = sand.u32 %s71, 1
        %s1171 = smul.addr %s1170, 4
        %s1172 = scalar_lea.vmem [#allocation2], %s1171
        // Predicated region
        $region29: #{run.1} parent=27 // pred_check
          %p1173 = pneg %p81
        $region30: #{run.1} parent=27 // pred_check_branch
          %1175 = sbr.rel (%p1173) target = $region32
        $region31: #{run.1} parent=27 // pred_region
          %s1176 = smul.u32 4, %s16
          %s1178 = ssub.s32 64, 64
          %1179 = vsyncadd %s1169, %s1178
          %s1180 = smul.addr %s1176, 16
          %s1181 = scalar_lea.hbm %s2, %s1180
          %s1183 = sshll.u32 %s1172, 4
          %s1184 = int_to_ptr.vmem [resolvable:$true] %s1183
          %1186 = dma.vmem_to_hbm [thread:$0]  %s1184, 64, %s1181, %s1169
        $region32: #{run.1} parent=27 // pred_fallthru
          _
      $region28: #{run.1} parent=5 // pred_fallthru
        _
      %p1187 = scmp.le.s32.totalorder 2, %s11
      // Predicated region
      $region33: #{run.1} parent=5 // pred_check
        %p1188 = pneg %p1187
      $region34: #{run.1} parent=5 // pred_check_branch
        %1190 = sbr.rel (%p1188) target = $region36
      $region35: #{run.1} parent=5 // pred_region
        %s1191 = ssub.s32 %s11, 2
        // Predicated region
        $region37: #{run.1} parent=35 // pred_check
          %p1192 = pneg %p87
        $region38: #{run.1} parent=35 // pred_check_branch
          %1194 = sbr.rel (%p1192) target = $region40
        $region39: #{run.1} parent=35 // pred_region
          %s1195 = sand.u32 %s72, 1
          %s1196 = scalar_lea.sflag [#allocation3], %s1195
          %s1197 = sand.u32 %s72, 1
          %s1198 = smul.addr %s1197, 4
          %s1199 = scalar_lea.vmem [#allocation2], %s1198
          %1200 = dma.done %s1196, 64
        $region40: #{run.1} parent=35 // pred_fallthru
          _
      $region36: #{run.1} parent=5 // pred_fallthru
        _
    $region6: #{run.1} parent=1 // loop_footer
      %s15 = sadd.s32 1, %s11
    $region7: #{run.1} parent=1 // loop_footer_branch
      %10 = sbr.rel target = $region3
    $region8: #{run.1} parent=1 // loop_exit
      _
    %1201 = vsyncpa [#allocation3], 1
    %s1202 = scalar_lea.sflag [#allocation3], 1
    %1203 = vsyncpa %s1202, 1

</llo_original>
